<compile_context>
chip_gen: v6e
topology: v6e:2x2x1
jax: 0.10.0
libtpu: 0.0.40
codegen_flags: <defaults>
</compile_context>

<pallas_src>
import math

import jax
import jax.numpy as jnp
from jax.experimental import pallas as pl
from jax.experimental.pallas import tpu as pltpu

VMEM_SPEC = pl.BlockSpec(memory_space=pltpu.MemorySpace.VMEM)
SMEM_SPEC = pl.BlockSpec(memory_space=pltpu.MemorySpace.SMEM)

_VMEM_LIMIT = 64 * 1024 * 1024  # raise scoped VMEM limit (v5e default is only 16 MiB)


def _pick_row_tile(n, bytes_per_elem=2, vmem_budget=24 * 1024 * 1024):
    """Largest row tile (multiple of 8, divides n) whose double-buffered (tm, n)
    adjacency blocks stay inside a VMEM budget.  Falls back to the full n."""
    cap = max(8, vmem_budget // max(1, 2 * n * bytes_per_elem))
    for t in (1024, 512, 256, 128, 64, 32, 16, 8):
        if t <= cap and n % t == 0:
            return t
    return n


def _compiler_params():
    return pltpu.CompilerParams(dimension_semantics=("parallel",),
                                vmem_limit_bytes=_VMEM_LIMIT)


# --------------------------------------------------------------------------- kernels
def _gcn_layer_kernel(a_ref, h_ref, w_ref, b_ref, out_ref):
    """One GCN layer for a destination-row tile: relu((A_tile @ H_full) @ W + b).
    bf16 matmul operands, f32 accumulation / elementwise."""
    agg = jnp.dot(a_ref[...], h_ref[...], preferred_element_type=jnp.float32)
    z = jnp.dot(agg.astype(jnp.bfloat16), w_ref[...],
                preferred_element_type=jnp.float32)
    out_ref[...] = jnp.maximum(z + b_ref[...], 0.0).astype(out_ref.dtype)


def _make_gcn_last_kernel(num_prev_tiled, lh, c_pad):
    """Last GCN layer + lane-dense packing of all per-layer features + the
    reassociated SAGPool score projections (r_rel, r_root)."""

    def kernel(*refs):
        a_ref, hfull_ref, htile_ref, w_ref, b_ref, wsc_ref = refs[:6]
        prev_refs = refs[6:6 + num_prev_tiled]
        xcat_ref, rr_ref = refs[6 + num_prev_tiled], refs[7 + num_prev_tiled]

        agg = jnp.dot(a_ref[...], hfull_ref[...], preferred_element_type=jnp.float32)
        z = jnp.dot(agg.astype(jnp.bfloat16), w_ref[...],
                    preferred_element_type=jnp.float32)
        h_last = jnp.maximum(z + b_ref[...], 0.0)                     # (tm, H) f32

        parts = [r[...].astype(jnp.float32) for r in prev_refs]       # h_0 .. h_{L-3}
        parts.append(htile_ref[...].astype(jnp.float32))              # h_{L-2}
        parts.append(h_last)                                          # h_{L-1}
        pad = c_pad - lh
        if pad > 0:
            parts.append(jnp.zeros((h_last.shape[0], pad), jnp.float32))
        xcat = jnp.concatenate(parts, axis=-1)                        # (tm, c_pad)
        xcat_ref[...] = xcat                                          # lane-dense store
        # col 0 = xcat @ w_rel, col 1 = xcat @ w_root, remaining lanes zero.
        rr_ref[...] = jnp.dot(xcat, wsc_ref[...], preferred_element_type=jnp.float32)

    return kernel


def _score_kernel(a_ref, rr_full_ref, rr_tile_ref, b_rel_ref, s_ref):
    """SAGPool attention score for a row tile:
       s = tanh(A_sum_tile @ r_rel + r_root_tile + b_rel), broadcast to 128 lanes."""
    r_rel = rr_full_ref[:, 0:1].astype(jnp.bfloat16)                  # (N, 1)
    prop = jnp.dot(a_ref[...], r_rel, preferred_element_type=jnp.float32)  # (tm, 1)
    r_root = rr_tile_ref[:, 1:2]                                      # (tm, 1) f32
    s = jnp.tanh(prop + r_root + b_rel_ref[0, 0])
    s_ref[...] = jnp.broadcast_to(s, s_ref.shape)


def _head_kernel(xsel_ref, bsel_ref, w1_ref, b1_ref, w2_ref, b2_ref, out_ref):
    """global_mean_pool (segment matrix + counts built in-kernel) + lin1/relu + lin2
    + log_softmax.  All f32 (tiny shapes)."""
    num_graphs = out_ref.shape[0]
    n_sel = bsel_ref.shape[1]
    seg = (jax.lax.broadcasted_iota(jnp.int32, (num_graphs, n_sel), 0)
           == bsel_ref[...]).astype(jnp.float32)                      # (G, N_sel)
    pooled = jnp.dot(seg, xsel_ref[...], preferred_element_type=jnp.float32)
    cnt = jnp.sum(seg, axis=-1, keepdims=True)
    pooled = pooled / jnp.maximum(cnt, 1.0)                           # mean per graph
    h = jnp.maximum(
        jnp.dot(pooled, w1_ref[...], preferred_element_type=jnp.float32)
        + b1_ref[...], 0.0)
    # TODO(synk): F.dropout(p=0.5) is identity here (eval mode); training mode would use
    # pltpu.prng_seed / pltpu.prng_random_bits.
    logits = (jnp.dot(h, w2_ref[...], preferred_element_type=jnp.float32)
              + b2_ref[...])
    m = jnp.max(logits, axis=-1, keepdims=True)
    lse = m + jnp.log(jnp.sum(jnp.exp(logits - m), axis=-1, keepdims=True))
    out_ref[...] = logits - lse


# --------------------------------------------------------------------------- wrappers
def _gcn_layer(a_bf16, h_bf16, w_bf16, b_f32, tm):
    n = a_bf16.shape[0]
    f_in = h_bf16.shape[1]
    hidden = w_bf16.shape[1]
    return pl.pallas_call(
        _gcn_layer_kernel,
        out_shape=jax.ShapeDtypeStruct((n, hidden), jnp.bfloat16),
        grid=(n // tm,),
        in_specs=[
            pl.BlockSpec((tm, n), lambda i: (i, 0)),        # adjacency row tile
            pl.BlockSpec((n, f_in), lambda i: (0, 0)),      # previous features (resident)
            pl.BlockSpec((f_in, hidden), lambda i: (0, 0)),
            pl.BlockSpec((1, hidden), lambda i: (0, 0)),
        ],
        out_specs=pl.BlockSpec((tm, hidden), lambda i: (i, 0)),
        compiler_params=_compiler_params(),
    )(a_bf16, h_bf16, w_bf16, b_f32)


def _gcn_last_layer(a_bf16, h_prev, prev_tiled, w_bf16, b_f32, w_score, tm, lh, c_pad):
    n = a_bf16.shape[0]
    f_in = h_prev.shape[1]
    hidden = w_bf16.shape[1]
    in_specs = ([
        pl.BlockSpec((tm, n), lambda i: (i, 0)),            # adjacency row tile
        pl.BlockSpec((n, f_in), lambda i: (0, 0)),          # h_{L-2} full (matmul operand)
        pl.BlockSpec((tm, f_in), lambda i: (i, 0)),         # h_{L-2} row tile (packing)
        pl.BlockSpec((f_in, hidden), lambda i: (0, 0)),     # W_{L-1}
        pl.BlockSpec((1, hidden), lambda i: (0, 0)),        # b_{L-1}
        pl.BlockSpec((c_pad, 128), lambda i: (0, 0)),       # [w_rel | w_root] zero-padded
    ] + [pl.BlockSpec((tm, hidden), lambda i: (i, 0)) for _ in prev_tiled])
    return pl.pallas_call(
        _make_gcn_last_kernel(len(prev_tiled), lh, c_pad),
        out_shape=(jax.ShapeDtypeStruct((n, c_pad), jnp.float32),
                   jax.ShapeDtypeStruct((n, 128), jnp.float32)),
        grid=(n // tm,),
        in_specs=in_specs,
        out_specs=(pl.BlockSpec((tm, c_pad), lambda i: (i, 0)),
                   pl.BlockSpec((tm, 128), lambda i: (i, 0))),
        compiler_params=_compiler_params(),
    )(a_bf16, h_prev, h_prev, w_bf16, b_f32, w_score, *prev_tiled)


def _sag_score(a_sum_bf16, rr, b_rel, tm):
    n = a_sum_bf16.shape[0]
    return pl.pallas_call(
        _score_kernel,
        out_shape=jax.ShapeDtypeStruct((n, 128), jnp.float32),
        grid=(n // tm,),
        in_specs=[
            pl.BlockSpec((tm, n), lambda i: (i, 0)),        # a_sum row tile
            pl.BlockSpec((n, 128), lambda i: (0, 0)),       # r projections, all rows
            pl.BlockSpec((tm, 128), lambda i: (i, 0)),      # r projections, this tile
            SMEM_SPEC,                                      # b_rel scalar
        ],
        out_specs=pl.BlockSpec((tm, 128), lambda i: (i, 0)),
        compiler_params=_compiler_params(),
    )(a_sum_bf16, rr, rr, b_rel)


def init_params(key, num_node_features, hidden, num_layers, num_classes):
    n_keys = 2 * num_layers + 8
    keys = list(jax.random.split(key, n_keys))
    params = {"gcn_w": [], "gcn_b": []}
    in_dim = num_node_features
    for _ in range(num_layers):
        params["gcn_w"].append(
            jax.random.normal(keys.pop(), (in_dim, hidden), jnp.float32)
            * (1.0 / math.sqrt(in_dim)))
        params["gcn_b"].append(
            0.1 * jax.random.normal(keys.pop(), (1, hidden), jnp.float32))
        in_dim = hidden
    lh = num_layers * hidden
    params["w_rel"] = jax.random.normal(keys.pop(), (lh, 1), jnp.float32) / math.sqrt(lh)
    params["b_rel"] = 0.1 * jax.random.normal(keys.pop(), (1, 1), jnp.float32)
    params["w_root"] = jax.random.normal(keys.pop(), (lh, 1), jnp.float32) / math.sqrt(lh)
    params["lin1_w"] = jax.random.normal(keys.pop(), (lh, hidden), jnp.float32) / math.sqrt(lh)
    params["lin1_b"] = 0.1 * jax.random.normal(keys.pop(), (1, hidden), jnp.float32)
    params["lin2_w"] = jax.random.normal(keys.pop(), (hidden, num_classes), jnp.float32) / math.sqrt(hidden)
    params["lin2_b"] = 0.1 * jax.random.normal(keys.pop(), (1, num_classes), jnp.float32)
    return params


def sagpool_forward(x, edge_index, edge_attr, batch, params, *, num_graphs, ratio=0.8):
    n = x.shape[0]
    num_layers = len(params["gcn_w"])
    assert num_layers >= 2, "demo forward assumes >= 2 GCN layers"
    hidden = params["gcn_w"][0].shape[1]
    lh = num_layers * hidden
    c_pad = ((lh + 127) // 128) * 128
    num_classes = params["lin2_w"].shape[1]
    row, col = edge_index[0], edge_index[1]

    # Dense GCN-normalized adjacency (add_self_loops=False) and the unweighted sum-aggregation
    # adjacency for the SAGPool score GraphConv.  XLA scatter-add build, stored as bf16
    # matmul operands (a_sum is 0/1 so bf16 is lossless).
    deg = jnp.zeros((n,), jnp.float32).at[col].add(edge_attr)
    dis = jnp.where(deg > 0.0, 1.0 / jnp.sqrt(jnp.maximum(deg, 1e-12)), 0.0)
    norm = dis[row] * edge_attr * dis[col]
    a_norm = jnp.zeros((n, n), jnp.float32).at[col, row].add(norm).astype(jnp.bfloat16)
    a_sum = jnp.zeros((n, n), jnp.float32).at[col, row].add(1.0).astype(jnp.bfloat16)

    tm = _pick_row_tile(n)

    # GCN stack: h_l = relu((A @ h_{l-1}) @ W_l + b_l); bf16 activations between layers.
    h = x.astype(jnp.bfloat16)
    hs = []
    for l in range(num_layers - 1):
        h = _gcn_layer(a_norm, h, params["gcn_w"][l].astype(jnp.bfloat16),
                       params["gcn_b"][l], tm)
        hs.append(h)

    # Last layer fused with feature packing + reassociated score projections.
    w_score = jnp.zeros((c_pad, 128), jnp.float32)
    w_score = w_score.at[:lh, 0].set(params["w_rel"][:, 0])
    w_score = w_score.at[:lh, 1].set(params["w_root"][:, 0])
    xcat_pad, rr = _gcn_last_layer(
        a_norm, hs[-1], hs[:-1],
        params["gcn_w"][num_layers - 1].astype(jnp.bfloat16),
        params["gcn_b"][num_layers - 1], w_score, tm, lh, c_pad)

    # SAGPool attention score s = tanh(A_sum @ r_rel + r_root + b_rel).
    score_wide = _sag_score(a_sum, rr, params["b_rel"], tm)
    score = score_wide[:, 0]                                           # (N,)

    # ---- SAGPooling top-k selection + gather (data-dependent: JAX glue) ----
    nodes_per_graph = n // num_graphs            # equal-size graphs in this demo
    k = int(math.ceil(ratio * nodes_per_graph))  # PyG topk: ceil(ratio * n_g)
    _, idx = jax.lax.top_k(score.reshape(num_graphs, nodes_per_graph), k)
    offs = (jnp.arange(num_graphs, dtype=jnp.int32) * nodes_per_graph)[:, None]
    perm = (idx.astype(jnp.int32) + offs).reshape(-1)                  # (G*k,)
    x_sel = xcat_pad[perm] * score[perm][:, None]                      # gather + tanh-score scale
    batch_sel = batch[perm].astype(jnp.int32).reshape(1, -1)           # (1, G*k)

    # Head: segment-mean pooling + MLP + log_softmax (single tiny call, no grid).
    w1_pad = jnp.zeros((c_pad, hidden), jnp.float32).at[:lh, :].set(params["lin1_w"])
    logp = pl.pallas_call(
        _head_kernel,
        out_shape=jax.ShapeDtypeStruct((num_graphs, num_classes), jnp.float32),
        in_specs=[VMEM_SPEC] * 6,
        out_specs=VMEM_SPEC,
    )(x_sel, batch_sel, w1_pad, params["lin1_b"], params["lin2_w"], params["lin2_b"])
    return logp


if __name__ == "__main__":
    # Small deterministic problem: 2 graphs x 8 nodes, 8 node features,
    # hidden=32, num_layers=2, num_classes=4, ratio=0.8.
    num_graphs, nodes_per_graph = 2, 8
    num_node_features, hidden, num_layers, num_classes = 8, 32, 2, 4
    ratio = 0.8
    N = num_graphs * nodes_per_graph

    key = jax.random.PRNGKey(0)
    k_x, k_w, k_e = jax.random.split(key, 3)

    x = jax.random.normal(k_x, (N, num_node_features), jnp.float32)
    batch = jnp.repeat(jnp.arange(num_graphs, dtype=jnp.int32), nodes_per_graph)

    edges = []
    for g in range(num_graphs):
        off = g * nodes_per_graph
        for i in range(nodes_per_graph):
            edges.append((off + i, off + (i + 1) % nodes_per_graph))
            edges.append((off + (i + 1) % nodes_per_graph, off + i))
            edges.append((off + i, off + (i + 3) % nodes_per_graph))
    edge_index = jnp.asarray(edges, dtype=jnp.int32).T               # (2, E)
    num_edges = edge_index.shape[1]
    edge_attr = 0.5 + jax.random.uniform(k_e, (num_edges,), jnp.float32)

    params = init_params(k_w, num_node_features, hidden, num_layers, num_classes)

    out = sagpool_forward(x, edge_index, edge_attr, batch, params,
                          num_graphs=num_graphs, ratio=ratio)
    out = jax.block_until_ready(out)

    assert out.shape == (num_graphs, num_classes)
    assert bool(jnp.all(jnp.isfinite(out)))
    # log_softmax rows should exponentiate to ~1.
    assert bool(jnp.allclose(jnp.sum(jnp.exp(out), axis=-1), 1.0, atol=1e-4))
    print("KERNEL_OK")
</pallas_src>

<mosaic_0001>
module attributes {stable_mosaic.version = 11 : i64} {
  func.func @_gcn_layer_kernel(%arg0: i32, %arg1: memref<16x16xbf16, #tpu.memory_space<vmem>>, %arg2: memref<16x8xbf16, #tpu.memory_space<vmem>>, %arg3: memref<8x32xbf16, #tpu.memory_space<vmem>>, %arg4: memref<1x32xf32, #tpu.memory_space<vmem>>, %arg5: memref<16x32xbf16, #tpu.memory_space<vmem>>) attributes {dimension_semantics = [#tpu.dimension_semantics<parallel>], iteration_bounds = array<i64: 1>, scalar_prefetch = 0 : i64, scratch_operands = 0 : i64, tpu.core_type = #tpu.core_type<tc>, window_params = [{transform_indices = @transform_0, window_bounds = array<i64: 16, 16>}, {pipeline_mode = #tpu.pipeline_mode<synchronous>, transform_indices = @transform_1, window_bounds = array<i64: 16, 8>}, {pipeline_mode = #tpu.pipeline_mode<synchronous>, transform_indices = @transform_2, window_bounds = array<i64: 8, 32>}, {pipeline_mode = #tpu.pipeline_mode<synchronous>, transform_indices = @transform_3, window_bounds = array<i64: 1, 32>}, {transform_indices = @transform_4, window_bounds = array<i64: 16, 32>}]} {
    %c0 = arith.constant 0 : index
    %c0_0 = arith.constant 0 : index
    %0 = vector.load %arg1[%c0, %c0_0] : memref<16x16xbf16, #tpu.memory_space<vmem>>, vector<16x16xbf16>
    %c0_1 = arith.constant 0 : index
    %c0_2 = arith.constant 0 : index
    %1 = vector.load %arg2[%c0_1, %c0_2] : memref<16x8xbf16, #tpu.memory_space<vmem>>, vector<16x8xbf16>
    %cst = arith.constant dense<0.000000e+00> : vector<16x8xf32>
    %2 = tpu.matmul %0, %1, %cst {dimension_numbers = #tpu.dot_dimension_numbers<[1], [0], [0], [1], [0, 0, 1, 1], [], []>} : vector<16x16xbf16>, vector<16x8xbf16>, vector<16x8xf32> -> vector<16x8xf32>
    %3 = arith.truncf %2 : vector<16x8xf32> to vector<16x8xbf16>
    %c0_3 = arith.constant 0 : index
    %c0_4 = arith.constant 0 : index
    %4 = vector.load %arg3[%c0_3, %c0_4] : memref<8x32xbf16, #tpu.memory_space<vmem>>, vector<8x32xbf16>
    %cst_5 = arith.constant dense<0.000000e+00> : vector<16x32xf32>
    %5 = tpu.matmul %3, %4, %cst_5 {dimension_numbers = #tpu.dot_dimension_numbers<[1], [0], [0], [1], [0, 0, 1, 1], [], []>} : vector<16x8xbf16>, vector<8x32xbf16>, vector<16x32xf32> -> vector<16x32xf32>
    %c0_6 = arith.constant 0 : index
    %c0_7 = arith.constant 0 : index
    %6 = vector.load %arg4[%c0_6, %c0_7] : memref<1x32xf32, #tpu.memory_space<vmem>>, vector<1x32xf32>
    %7 = vector.broadcast %6 : vector<1x32xf32> to vector<16x32xf32>
    %8 = arith.addf %5, %7 : vector<16x32xf32>
    %cst_8 = arith.constant 0.000000e+00 : f32
    %9 = vector.broadcast %cst_8 : f32 to vector<16x32xf32>
    %10 = arith.maximumf %8, %9 : vector<16x32xf32>
    %11 = arith.truncf %10 : vector<16x32xf32> to vector<16x32xbf16>
    %c0_9 = arith.constant 0 : index
    %c0_10 = arith.constant 0 : index
    %12 = vector.load %arg5[%c0_9, %c0_10] : memref<16x32xbf16, #tpu.memory_space<vmem>>, vector<16x32xbf16>
    tpu.vector_store %arg5[%c0_9, %c0_10], %11 {strides = array<i32>} : memref<16x32xbf16, #tpu.memory_space<vmem>>, vector<16x32xbf16>,
    return
  }
  func.func @transform_0(%arg0: i32) -> (i32, i32) {
    %c0_i32 = arith.constant 0 : i32
    %c0_i32_0 = arith.constant 0 : i32
    return %arg0, %c0_i32 : i32, i32
  }
  func.func @transform_1(%arg0: i32) -> (i32, i32) {
    %c0_i32 = arith.constant 0 : i32
    %c0_i32_0 = arith.constant 0 : i32
    %c0_i32_1 = arith.constant 0 : i32
    return %c0_i32, %c0_i32_0 : i32, i32
  }
  func.func @transform_2(%arg0: i32) -> (i32, i32) {
    %c0_i32 = arith.constant 0 : i32
    %c0_i32_0 = arith.constant 0 : i32
    %c0_i32_1 = arith.constant 0 : i32
    return %c0_i32, %c0_i32_0 : i32, i32
  }
  func.func @transform_3(%arg0: i32) -> (i32, i32) {
    %c0_i32 = arith.constant 0 : i32
    %c0_i32_0 = arith.constant 0 : i32
    %c0_i32_1 = arith.constant 0 : i32
    return %c0_i32, %c0_i32_0 : i32, i32
  }
  func.func @transform_4(%arg0: i32) -> (i32, i32) {
    %c0_i32 = arith.constant 0 : i32
    %c0_i32_0 = arith.constant 0 : i32
    return %arg0, %c0_i32 : i32, i32
  }
}

</mosaic_0001>

<llo_original>
// kernel: tpu_custom_call.1
$region0: #{tpu_custom_call.1}
  #allocation0 [shape = 'u32[]', space=smem, size = 0x4, offset = 0x4, fixed_abs, tag = 'smem constant byte address 0x4 - core index']
  #allocation1 [shape = 'u32[144,128]{1,0:T(1,128)}', space=vmem, size = 0x12000, scoped, tag = 'internal scratch']
  %s0 = inlined_call_operand.vmem [shape: bf16[16,16], index: 0, kind: input, shape index: {}]
  %s1 = inlined_call_operand.vmem [shape: bf16[16,8], index: 1, kind: input, shape index: {}]
  %s2 = inlined_call_operand.vmem [shape: bf16[8,32], index: 2, kind: input, shape index: {}]
  %s3 = inlined_call_operand.vmem [shape: f32[1,32], index: 3, kind: input, shape index: {}]
  %s4 = inlined_call_operand.hbm [shape: bf16[16,32], index: 4, kind: output, shape index: {}]
  %s5 = sld [smem:[#allocation0]]
  $region26: #{tpu_custom_call.1} parent=0
    _
  %s7 = ssub.s32 1, %s5
  %s8 = scalar_select 0, %s7, %s5
  $region1: #{tpu_custom_call.1} parent=0
    #allocation2 [shape = 'u8[4096]{0}', space=vmem, size = 0x1000, scoped, tag = 'output window, operand 0, single buffered']
    #allocation3 [shape = 's32[1]{0}', space=sflag, size = 0x4, scoped, tag = 'scoped memory for tpu_custom_call.1']
    %9 = vsyncpa [#allocation3], 0
    // Predicated region
    $region2: #{tpu_custom_call.1} parent=1 // pred_check
      _
    $region3: #{tpu_custom_call.1} parent=1 // pred_check_branch
      %11 = sbr.rel (0) target = $region5
    $region4: #{tpu_custom_call.1} parent=1 // pred_region
      _
    $region5: #{tpu_custom_call.1} parent=1 // pred_fallthru
      _
    // Predicated region
    $region6: #{tpu_custom_call.1} parent=1 // pred_check
      _
    $region7: #{tpu_custom_call.1} parent=1 // pred_check_branch
      %13 = sbr.rel (0) target = $region9
    $region8: #{tpu_custom_call.1} parent=1 // pred_region
      _
    $region9: #{tpu_custom_call.1} parent=1 // pred_fallthru
      _
    // Predicated region
    $region10: #{tpu_custom_call.1} parent=1 // pred_check
      _
    $region11: #{tpu_custom_call.1} parent=1 // pred_check_branch
      %15 = sbr.rel (0) target = $region13
    $region12: #{tpu_custom_call.1} parent=1 // pred_region
      _
    $region13: #{tpu_custom_call.1} parent=1 // pred_fallthru
      _
    // Predicated region
    $region14: #{tpu_custom_call.1} parent=1 // pred_check
      _
    $region15: #{tpu_custom_call.1} parent=1 // pred_check_branch
      %17 = sbr.rel (0) target = $region17
    $region16: #{tpu_custom_call.1} parent=1 // pred_region
      _
    $region17: #{tpu_custom_call.1} parent=1 // pred_fallthru
      _
    %v19 = vld [vmem:[%s0] sm:$0xf]
    %v20 = vld [vmem:[%s0 + $0x4] sm:$0xf]
    %v21 = vld [vmem:[%s1] sm:$0xf]
    %v22 = vld [vmem:[%s1 + $0x4] sm:$0xf]
    %v25 = vunpack.c.l.b16 %v19
    %v26 = vunpack.c.l.b16 %v20
    %v27 = vpack.c.b16 %v26, %v25
    %v30 = vunpack.c.l.b16 %v21
    %v31 = vunpack.c.l.b16 %v22
    %v32 = vpack.c.b16 %v31, %v30
    %vm34 = vcmask 130048
    %v36 = vsel %vm34, %v27, 0
    %38 = vmatprep.subr.bf16.mxu0 0
    %39 = vmatpush1.bf16.msra.mxu0 0
    %40 = vmatprep.subr.bf16.mxu0 0
    %41 = vmatpush1.bf16.msra.mxu0 0
    %42 = vmatprep.subr.bf16.mxu0 0
    %43 = vmatpush1.bf16.msra.mxu0 0
    %44 = vmatprep.subr.bf16.mxu0 0
    %45 = vmatpush1.bf16.msra.mxu0 0
    %46 = vmatprep.subr.bf16.mxu0 0
    %47 = vmatpush1.bf16.msra.mxu0 0
    %48 = vmatprep.subr.bf16.mxu0 0
    %49 = vmatpush1.bf16.msra.mxu0 0
    %50 = vmatprep.subr.bf16.mxu0 0
    %51 = vmatpush1.bf16.msra.mxu0 0
    %52 = vmatprep.subr.bf16.mxu0 0
    %53 = vmatpush1.bf16.msra.mxu0 %v32
    %54 = vmatprep.subr.bf16.mxu0 0
    %55 = vmatpush2.bf16.msra.mxu0 0
    %56 = vmatprep.subr.bf16.mxu0 0
    %57 = vmatpush2.bf16.msra.mxu0 0
    %58 = vmatprep.subr.bf16.mxu0 0
    %59 = vmatpush2.bf16.msra.mxu0 0
    %60 = vmatprep.subr.bf16.mxu0 0
    %61 = vmatpush2.bf16.msra.mxu0 0
    %62 = vmatprep.subr.bf16.mxu0 0
    %63 = vmatpush2.bf16.msra.mxu0 0
    %64 = vmatprep.subr.bf16.mxu0 0
    %65 = vmatpush2.bf16.msra.mxu0 0
    %66 = vmatprep.subr.bf16.mxu0 0
    %67 = vmatpush2.bf16.msra.mxu0 0
    %68 = vmatprep.subr.bf16.mxu0 0
    %69 = vmatpush2.bf16.msra.mxu0 0
    %70 = vmatprep.mubr.bf16.mxu0 0
    %71 = vmatmul.mubr.bf16.gmra.mxu0 %v36
    %v72 = vpop.f32.mrf.mxu0
    %v73 = vadd.f32 0.0, %v72
    %v74 = vpop.f32.mrf.mxu0
    %v75 = vpop.f32.mrf.mxu0
    %v76 = vadd.f32 0.0, %v75
    %v77 = vpop.f32.mrf.mxu0
    %78 = vdwg.mxu0
    %v79 = vpack.c.bf16 %v76, %v73
    %v80 = vld [vmem:[%s2] sm:$0xf]
    %v81 = vld [vmem:[%s3] sm:$0x1]
    %v83 = vlaneseq
    %v84 = vshrl.u32 %v83, 7
    %v85 = vsub.s32 0, %v84
    %v86 = vrot.slane %v81, %v85
    %vm88 = vcmask 64512
    %v90 = vsel %vm88, %v79, 0
    %vm92 = vcmask 1043456
    %v94 = vsel %vm92, %v80, 0
    %96 = vmatprep.subr.bf16.mxu0 0
    %97 = vmatpush1.bf16.msra.mxu0 0
    %98 = vmatprep.subr.bf16.mxu0 0
    %99 = vmatpush1.bf16.msra.mxu0 0
    %100 = vmatprep.subr.bf16.mxu0 0
    %101 = vmatpush1.bf16.msra.mxu0 0
    %102 = vmatprep.subr.bf16.mxu0 0
    %103 = vmatpush1.bf16.msra.mxu0 0
    %104 = vmatprep.subr.bf16.mxu0 0
    %105 = vmatpush1.bf16.msra.mxu0 0
    %106 = vmatprep.subr.bf16.mxu0 0
    %107 = vmatpush1.bf16.msra.mxu0 0
    %108 = vmatprep.subr.bf16.mxu0 0
    %109 = vmatpush1.bf16.msra.mxu0 0
    %110 = vmatprep.subr.bf16.mxu0 0
    %111 = vmatpush1.bf16.msra.mxu0 %v94
    %112 = vmatprep.subr.bf16.mxu0 0
    %113 = vmatpush2.bf16.msra.mxu0 0
    %114 = vmatprep.subr.bf16.mxu0 0
    %115 = vmatpush2.bf16.msra.mxu0 0
    %116 = vmatprep.subr.bf16.mxu0 0
    %117 = vmatpush2.bf16.msra.mxu0 0
    %118 = vmatprep.subr.bf16.mxu0 0
    %119 = vmatpush2.bf16.msra.mxu0 0
    %120 = vmatprep.subr.bf16.mxu0 0
    %121 = vmatpush2.bf16.msra.mxu0 0
    %122 = vmatprep.subr.bf16.mxu0 0
    %123 = vmatpush2.bf16.msra.mxu0 0
    %124 = vmatprep.subr.bf16.mxu0 0
    %125 = vmatpush2.bf16.msra.mxu0 0
    %126 = vmatprep.subr.bf16.mxu0 0
    %127 = vmatpush2.bf16.msra.mxu0 0
    %128 = vmatprep.mubr.bf16.mxu0 0
    %129 = vmatmul.mubr.bf16.gmra.mxu0 %v90
    %v130 = vpop.f32.mrf.mxu0
    %v131 = vadd.f32 %v86, %v130
    %v132 = vpop.f32.mrf.mxu0
    %v133 = vpop.f32.mrf.mxu0
    %v134 = vadd.f32 %v86, %v133
    %v135 = vpop.f32.mrf.mxu0
    %136 = vdwg.mxu0
    %v137 = vmax.f32 %v131, 0.0
    %v138 = vmax.f32 %v134, 0.0
    %v139 = vpack.c.bf16 %v138, %v137
    %v141 = vunpack.c.l.b16 %v139
    %v142 = vunpack.c.h.b16 %v139
    %v143 = vpack.c.b16 %v141, %v141
    %v144 = vpack.c.b16 %v142, %v142
    %vm147 = vcmask 257024
    %148 = vst.msk [vmem:[#allocation2] sm:$0xf] %vm147, %v143
    %149 = vst.msk [vmem:[#allocation2 + $0x4] sm:$0xf] %vm147, %v144
    // Predicated region
    $region18: #{tpu_custom_call.1} parent=1 // pred_check
      _
    $region19: #{tpu_custom_call.1} parent=1 // pred_check_branch
      %151 = sbr.rel (0) target = $region21
    $region20: #{tpu_custom_call.1} parent=1 // pred_region
      %s153 = ssub.s32 128, 128
      %154 = vsyncadd [#allocation3], %s153
      %s155 = sshll.u32 [#allocation2], 4
      %s156 = int_to_ptr.vmem [resolvable:$true] %s155
      %161 = dma.vmem_to_hbm [thread:$0]  %s156, 128, %s4, [#allocation3], 64, 64, 4
    $region21: #{tpu_custom_call.1} parent=1 // pred_fallthru
      _
    // Predicated region
    $region22: #{tpu_custom_call.1} parent=1 // pred_check
      _
    $region23: #{tpu_custom_call.1} parent=1 // pred_check_branch
      %163 = sbr.rel (0) target = $region25
    $region24: #{tpu_custom_call.1} parent=1 // pred_region
      %164 = dma.done [#allocation3], 128
    $region25: #{tpu_custom_call.1} parent=1 // pred_fallthru
      _
    %165 = vsyncpa [#allocation3], 1

</llo_original>
